<compile_context>
chip_gen: v6e
topology: v6e:2x2x1
jax: 0.10.0
libtpu: 0.0.40
codegen_flags: <defaults>
</compile_context>

<pallas_src>
import jax
import jax.numpy as jnp
from jax.experimental import pallas as pl
from jax.experimental.pallas import tpu as pltpu

HIDDEN = 128


def mlp_kernel(x_ref, w1_ref, b1_ref, w2_ref, b2_ref, w3_ref, b3_ref, o_ref):
    # x_ref : (1, Bt)   bf16   batch on the lane axis
    # w1_ref: (128, 1)  bf16,  b1_ref: (128, 1) bf16
    # w2_ref: (128,128) bf16,  b2_ref: (128, 1) f32
    # w3_ref: (128, 1)  f32,   b3_ref: (1, 1)   f32
    # o_ref : (1, Bt)   f32
    x = x_ref[...]                                               # (1, Bt) bf16

    # Layer 1 on the VPU (packed bf16): outer-product via broadcasting,
    # no MXU push for the degenerate K=1 matmul.
    h1 = jnp.maximum(w1_ref[...] * x + b1_ref[...], 0.0)        # (128, Bt) bf16

    # Layer 2 on the MXU: bf16 x bf16 inputs, f32 accumulation.
    h2 = jnp.dot(w2_ref[...], h1,
                 preferred_element_type=jnp.float32)             # (128, Bt) f32
    h2 = jnp.maximum(h2 + b2_ref[...], 0.0)

    # Layer 3 off the MXU: VPU multiply + axis-0 reduction (row-group vadds +
    # one cross-sublane reduce on the XLU, both slots have slack here).
    out = jnp.sum(h2 * w3_ref[...], axis=0, keepdims=True)       # (1, Bt) f32
    o_ref[...] = (out + b3_ref[...]).astype(o_ref.dtype)


def simple_net_forward(x, params, *, block_b=2048):
    """x: (B, 1) float32. Returns (B, 1) float32."""
    w1, b1, w2, b2, w3, b3 = params
    B = x.shape[0]
    assert block_b % 128 == 0, "batch tile must be lane-aligned (multiple of 128)"

    # Clamp the tile to the (128-rounded) batch so tiny batches don't over-pad.
    bb = min(block_b, ((B + 127) // 128) * 128)
    b_pad = pl.cdiv(B, bb) * bb

    # Batch goes on the lane axis; cast x once to bf16 and pad to whole tiles.
    x_t = jnp.transpose(x, (1, 0)).astype(jnp.bfloat16)          # (1, B) bf16
    if b_pad != B:
        x_t = jnp.pad(x_t, ((0, 0), (0, b_pad - B)))

    w1_bf = w1.astype(jnp.bfloat16)                              # (128, 1)
    b1_bf = b1.astype(jnp.bfloat16)                              # (128, 1)
    w2_bf = w2.astype(jnp.bfloat16)                              # (128, 128)
    w3_col = jnp.reshape(w3, (HIDDEN, 1)).astype(jnp.float32)    # (128, 1) column

    def const_spec(arr):
        return pl.BlockSpec(arr.shape, lambda i: (0,) * arr.ndim)

    grid = (b_pad // bb,)
    out_t = pl.pallas_call(
        mlp_kernel,
        out_shape=jax.ShapeDtypeStruct((1, b_pad), jnp.float32),
        grid_spec=pl.GridSpec(
            grid=grid,
            in_specs=[
                pl.BlockSpec((1, bb), lambda i: (0, i)),         # x tile (lane-dense)
                const_spec(w1_bf),
                const_spec(b1_bf),
                const_spec(w2_bf),
                const_spec(b2),
                const_spec(w3_col),
                const_spec(b3),
            ],
            out_specs=pl.BlockSpec((1, bb), lambda i: (0, i)),
        ),
        compiler_params=pltpu.CompilerParams(
            dimension_semantics=("parallel",),
        ),
    )(x_t, w1_bf, b1_bf, w2_bf, b2, w3_col, b3)

    return jnp.transpose(out_t[:, :B], (1, 0))                   # (B, 1) f32


def init_params(key):
    """Deterministic init matching SimpleNet's layer shapes.
    Weights are kept in the torch (out_features, in_features) layout; biases are
    stored as (out_features, 1) columns so they broadcast over the lane axis."""
    k1, k2, k3, k4, k5, k6 = jax.random.split(key, 6)
    w1 = jax.random.normal(k1, (HIDDEN, 1), jnp.float32) * 0.1
    b1 = jax.random.normal(k2, (HIDDEN, 1), jnp.float32) * 0.1
    w2 = jax.random.normal(k3, (HIDDEN, HIDDEN), jnp.float32) * 0.1
    b2 = jax.random.normal(k4, (HIDDEN, 1), jnp.float32) * 0.1
    w3 = jax.random.normal(k5, (1, HIDDEN), jnp.float32) * 0.1
    b3 = jax.random.normal(k6, (1, 1), jnp.float32) * 0.1
    return (w1, b1, w2, b2, w3, b3)


def reference_forward(x, params):
    """Pure-f32 reference in the standard (batch, features) layout."""
    w1, b1, w2, b2, w3, b3 = params
    h1 = jnp.maximum(x @ w1.T + b1.T, 0.0)
    h2 = jnp.maximum(h1 @ w2.T + b2.T, 0.0)
    return h2 @ w3.T + b3.T


if __name__ == "__main__":
    key = jax.random.PRNGKey(0)
    k_params, k_x = jax.random.split(key)
    params = init_params(k_params)

    B = 256                       # small test batch; block_b=128 -> 2 balanced grid
    x = jax.random.normal(k_x, (B, 1), jnp.float32)  # steps (both v7x TCs active)

    out = simple_net_forward(x, params, block_b=128)
    out = jax.block_until_ready(out)

    ref = reference_forward(x, params)
    assert out.shape == (B, 1)
    # Layers 1/2 run in bf16 (f32 accumulation for the matmul); tolerance relaxed.
    assert jnp.allclose(out, ref, atol=2e-2, rtol=2e-2), "mismatch vs reference"

    print("KERNEL_OK")
</pallas_src>

<mosaic_0001>
module attributes {stable_mosaic.version = 11 : i64} {
  func.func @mlp_kernel(%arg0: i32, %arg1: memref<1x128xbf16, #tpu.memory_space<vmem>>, %arg2: memref<128x1xbf16, #tpu.memory_space<vmem>>, %arg3: memref<128x1xbf16, #tpu.memory_space<vmem>>, %arg4: memref<128x128xbf16, #tpu.memory_space<vmem>>, %arg5: memref<128x1xf32, #tpu.memory_space<vmem>>, %arg6: memref<128x1xf32, #tpu.memory_space<vmem>>, %arg7: memref<1x1xf32, #tpu.memory_space<vmem>>, %arg8: memref<1x128xf32, #tpu.memory_space<vmem>>) attributes {dimension_semantics = [#tpu.dimension_semantics<parallel>], iteration_bounds = array<i64: 2>, scalar_prefetch = 0 : i64, scratch_operands = 0 : i64, tpu.core_type = #tpu.core_type<tc>, window_params = [{transform_indices = @transform_0, window_bounds = array<i64: 1, 128>}, {pipeline_mode = #tpu.pipeline_mode<synchronous>, transform_indices = @transform_1, window_bounds = array<i64: 128, 1>}, {pipeline_mode = #tpu.pipeline_mode<synchronous>, transform_indices = @transform_2, window_bounds = array<i64: 128, 1>}, {pipeline_mode = #tpu.pipeline_mode<synchronous>, transform_indices = @transform_3, window_bounds = array<i64: 128, 128>}, {pipeline_mode = #tpu.pipeline_mode<synchronous>, transform_indices = @transform_4, window_bounds = array<i64: 128, 1>}, {pipeline_mode = #tpu.pipeline_mode<synchronous>, transform_indices = @transform_5, window_bounds = array<i64: 128, 1>}, {pipeline_mode = #tpu.pipeline_mode<synchronous>, transform_indices = @transform_6, window_bounds = array<i64: 1, 1>}, {transform_indices = @transform_7, window_bounds = array<i64: 1, 128>}]} {
    %c0 = arith.constant 0 : index
    %c0_0 = arith.constant 0 : index
    %0 = vector.load %arg1[%c0, %c0_0] : memref<1x128xbf16, #tpu.memory_space<vmem>>, vector<1x128xbf16>
    %c0_1 = arith.constant 0 : index
    %c0_2 = arith.constant 0 : index
    %1 = vector.load %arg2[%c0_1, %c0_2] : memref<128x1xbf16, #tpu.memory_space<vmem>>, vector<128x1xbf16>
    %2 = vector.broadcast %1 : vector<128x1xbf16> to vector<128x128xbf16>
    %3 = vector.broadcast %0 : vector<1x128xbf16> to vector<128x128xbf16>
    %4 = arith.mulf %2, %3 : vector<128x128xbf16>
    %c0_3 = arith.constant 0 : index
    %c0_4 = arith.constant 0 : index
    %5 = vector.load %arg3[%c0_3, %c0_4] : memref<128x1xbf16, #tpu.memory_space<vmem>>, vector<128x1xbf16>
    %6 = vector.broadcast %5 : vector<128x1xbf16> to vector<128x128xbf16>
    %7 = arith.addf %4, %6 : vector<128x128xbf16>
    %cst = arith.constant 0.000000e+00 : bf16
    %8 = vector.broadcast %cst : bf16 to vector<128x128xbf16>
    %9 = arith.maximumf %7, %8 : vector<128x128xbf16>
    %c0_5 = arith.constant 0 : index
    %c0_6 = arith.constant 0 : index
    %10 = vector.load %arg4[%c0_5, %c0_6] : memref<128x128xbf16, #tpu.memory_space<vmem>>, vector<128x128xbf16>
    %cst_7 = arith.constant dense<0.000000e+00> : vector<128x128xf32>
    %11 = tpu.matmul %10, %9, %cst_7 {dimension_numbers = #tpu.dot_dimension_numbers<[1], [0], [0], [1], [0, 0, 1, 1], [], []>} : vector<128x128xbf16>, vector<128x128xbf16>, vector<128x128xf32> -> vector<128x128xf32>
    %c0_8 = arith.constant 0 : index
    %c0_9 = arith.constant 0 : index
    %12 = vector.load %arg5[%c0_8, %c0_9] : memref<128x1xf32, #tpu.memory_space<vmem>>, vector<128x1xf32>
    %13 = vector.broadcast %12 : vector<128x1xf32> to vector<128x128xf32>
    %14 = arith.addf %11, %13 : vector<128x128xf32>
    %cst_10 = arith.constant 0.000000e+00 : f32
    %15 = vector.broadcast %cst_10 : f32 to vector<128x128xf32>
    %16 = arith.maximumf %14, %15 : vector<128x128xf32>
    %c0_11 = arith.constant 0 : index
    %c0_12 = arith.constant 0 : index
    %17 = vector.load %arg6[%c0_11, %c0_12] : memref<128x1xf32, #tpu.memory_space<vmem>>, vector<128x1xf32>
    %18 = vector.broadcast %17 : vector<128x1xf32> to vector<128x128xf32>
    %19 = arith.mulf %16, %18 : vector<128x128xf32>
    %cst_13 = arith.constant dense<0.000000e+00> : vector<128xf32>
    %20 = vector.multi_reduction <add>, %19, %cst_13 [0] : vector<128x128xf32> to vector<128xf32>
    %21 = vector.shape_cast %20 : vector<128xf32> to vector<1x128xf32>
    %c0_14 = arith.constant 0 : index
    %c0_15 = arith.constant 0 : index
    %22 = vector.load %arg7[%c0_14, %c0_15] : memref<1x1xf32, #tpu.memory_space<vmem>>, vector<1x1xf32>
    %23 = vector.broadcast %22 : vector<1x1xf32> to vector<1x128xf32>
    %24 = arith.addf %21, %23 : vector<1x128xf32>
    %c0_16 = arith.constant 0 : index
    %c0_17 = arith.constant 0 : index
    %25 = vector.load %arg8[%c0_16, %c0_17] : memref<1x128xf32, #tpu.memory_space<vmem>>, vector<1x128xf32>
    tpu.vector_store %arg8[%c0_16, %c0_17], %24 {strides = array<i32>} : memref<1x128xf32, #tpu.memory_space<vmem>>, vector<1x128xf32>,
    return
  }
  func.func @transform_0(%arg0: i32) -> (i32, i32) {
    %c0_i32 = arith.constant 0 : i32
    %c0_i32_0 = arith.constant 0 : i32
    return %c0_i32, %arg0 : i32, i32
  }
  func.func @transform_1(%arg0: i32) -> (i32, i32) {
    %c0_i32 = arith.constant 0 : i32
    %c0_i32_0 = arith.constant 0 : i32
    %c0_i32_1 = arith.constant 0 : i32
    return %c0_i32, %c0_i32_0 : i32, i32
  }
  func.func @transform_2(%arg0: i32) -> (i32, i32) {
    %c0_i32 = arith.constant 0 : i32
    %c0_i32_0 = arith.constant 0 : i32
    %c0_i32_1 = arith.constant 0 : i32
    return %c0_i32, %c0_i32_0 : i32, i32
  }
  func.func @transform_3(%arg0: i32) -> (i32, i32) {
    %c0_i32 = arith.constant 0 : i32
    %c0_i32_0 = arith.constant 0 : i32
    %c0_i32_1 = arith.constant 0 : i32
    return %c0_i32, %c0_i32_0 : i32, i32
  }
  func.func @transform_4(%arg0: i32) -> (i32, i32) {
    %c0_i32 = arith.constant 0 : i32
    %c0_i32_0 = arith.constant 0 : i32
    %c0_i32_1 = arith.constant 0 : i32
    return %c0_i32, %c0_i32_0 : i32, i32
  }
  func.func @transform_5(%arg0: i32) -> (i32, i32) {
    %c0_i32 = arith.constant 0 : i32
    %c0_i32_0 = arith.constant 0 : i32
    %c0_i32_1 = arith.constant 0 : i32
    return %c0_i32, %c0_i32_0 : i32, i32
  }
  func.func @transform_6(%arg0: i32) -> (i32, i32) {
    %c0_i32 = arith.constant 0 : i32
    %c0_i32_0 = arith.constant 0 : i32
    %c0_i32_1 = arith.constant 0 : i32
    return %c0_i32, %c0_i32_0 : i32, i32
  }
  func.func @transform_7(%arg0: i32) -> (i32, i32) {
    %c0_i32 = arith.constant 0 : i32
    %c0_i32_0 = arith.constant 0 : i32
    return %c0_i32, %arg0 : i32, i32
  }
}

</mosaic_0001>

<llo_original>
// kernel: tpu_custom_call.1
$region0: #{tpu_custom_call.1}
  #allocation0 [shape = 'u32[]', space=smem, size = 0x4, offset = 0x4, fixed_abs, tag = 'smem constant byte address 0x4 - core index']
  #allocation1 [shape = 'u32[144,128]{1,0:T(1,128)}', space=vmem, size = 0x12000, scoped, tag = 'internal scratch']
  #allocation2 [shape = 'f32[1,1]{1,0:T(1,128)S(1)}', space=vmem, size = 0x200, scoped, tag = 'scoped memory for tpu_custom_call.1']
  %s0 = inlined_call_operand.vmem [shape: bf16[1,256], index: 0, kind: input, shape index: {}]
  %s1 = inlined_call_operand.vmem [shape: bf16[128,1], index: 1, kind: input, shape index: {}]
  %s2 = inlined_call_operand.vmem [shape: bf16[128,1], index: 2, kind: input, shape index: {}]
  %s3 = inlined_call_operand.vmem [shape: bf16[128,128], index: 3, kind: input, shape index: {}]
  %s4 = inlined_call_operand.vmem [shape: f32[128,1], index: 4, kind: input, shape index: {}]
  %s5 = inlined_call_operand.vmem [shape: f32[128,1], index: 5, kind: input, shape index: {}]
  %s6 = inlined_call_operand.<no memory space> [shape: f32[1,1], index: 6, kind: input, shape index: {}]
  %s7 = inlined_call_operand.hbm [shape: f32[1,256], index: 7, kind: output, shape index: {}]
  %s8 = sld [smem:[#allocation0]]
  $region61: #{tpu_custom_call.1} parent=0
    _
  %s10 = ssub.s32 1, %s8
  %s11 = scalar_select 0, %s10, %s8
  %v12 = vstv %s6
  %13 = vst [vmem:[#allocation2] sm:$0x1] %v12
  $region1: #{tpu_custom_call.1} parent=0
    #allocation3 [shape = 'u8[1024]{0}', space=vmem, size = 0x400, scoped, tag = 'output window, operand 0']
    #allocation4 [shape = 's32[2]{0}', space=sflag, size = 0x8, scoped, tag = 'scoped memory for tpu_custom_call.1']
    %14 = vsyncpa [#allocation4], 0
    %s15 = scalar_lea.sflag [#allocation4], 1
    %16 = vsyncpa %s15, 0
    loop: start=0, step=1, limit=4
    $region2: #{tpu_custom_call.1} parent=1 // loop_pre_header
      _
    $region3: #{tpu_custom_call.1} parent=1 // loop_header
      %s18 = sphi 0, %s22
      %p19 = scmp.ge.s32.totalorder %s18, 4
      %s28 = sphi 0, %s30
      %s31 = sphi 0, %s28
      %s32 = sphi 0, %s31
      %s48 = sphi 0, %s32
      %s52 = sphi 0, %s52
      %s54 = sphi 0, %s52
      %s55 = sphi 0, %s54
      %s69 = sphi 0, %s55
      %s73 = sphi 0, %s73
      %s75 = sphi 0, %s73
      %s76 = sphi 0, %s75
      %s90 = sphi 0, %s76
      %s94 = sphi 0, %s94
      %s96 = sphi 0, %s94
      %s97 = sphi 0, %s96
      %s111 = sphi 0, %s97
      %s115 = sphi 0, %s115
      %s117 = sphi 0, %s115
      %s118 = sphi 0, %s117
      %s132 = sphi 0, %s118
      %s136 = sphi 0, %s136
      %s138 = sphi 0, %s136
      %s139 = sphi 0, %s138
      %s153 = sphi 0, %s139
      %s157 = sphi 0, %s157
      %s159 = sphi 0, %s157
      %s160 = sphi 0, %s159
      %s174 = sphi 0, %s160
      %s180 = sphi 0, %s182
      %s183 = sphi 0, %s180
      %s184 = sphi 0, %s183
      %s200 = sphi 0, %s184
    $region4: #{tpu_custom_call.1} parent=1 // loop_header_branch
      %21 = sbr.rel (%p19) target = $region8
    $region5: #{tpu_custom_call.1} parent=1 // loop_body
      %s23 = ssub.s32 %s18, 1
      %s24 = ssub.s32 %s18, 2
      %s25 = sadd.s32 %s18, 1
      %s26 = ssub.s32 %s18, %s25
      %p27 = scmp.eq.s32.totalorder %s26, 0
      %s29 = sadd.s32 %s28, 1
      %s30 = scalar_select %p27, %s28, %s29
      %p33 = pneg %p27
      %p34 = scmp.eq.s32.totalorder %s18, 1
      %p35 = por %p33, %p34
      %p36 = scmp.ne.s32.totalorder %s28, %s31
      %p37 = scmp.eq.s32.totalorder %s18, 0
      %p38 = por %p36, %p37
      %p39 = scmp.ne.s32.totalorder %s28, %s31
      %p40 = scmp.eq.s32.totalorder %s23, 1
      %p41 = por %p39, %p40
      %p42 = scmp.ne.s32.totalorder %s31, %s32
      %p43 = scmp.eq.s32.totalorder %s23, 0
      %p44 = por %p42, %p43
      %p45 = scmp.ne.s32.totalorder %s31, %s32
      %p46 = scmp.eq.s32.totalorder %s24, 1
      %p47 = por %p45, %p46
      %p49 = scmp.ne.s32.totalorder %s32, %s48
      %p50 = scmp.eq.s32.totalorder %s24, 0
      %p51 = por %p49, %p50
      %s53 = sadd.s32 %s52, 1
      %p56 = scmp.eq.s32.totalorder %s18, 1
      %p57 = scmp.ne.s32.totalorder %s52, %s54
      %p58 = scmp.eq.s32.totalorder %s18, 0
      %p59 = por %p57, %p58
      %p60 = scmp.ne.s32.totalorder %s52, %s54
      %p61 = scmp.eq.s32.totalorder %s23, 1
      %p62 = por %p60, %p61
      %p63 = scmp.ne.s32.totalorder %s54, %s55
      %p64 = scmp.eq.s32.totalorder %s23, 0
      %p65 = por %p63, %p64
      %p66 = scmp.ne.s32.totalorder %s54, %s55
      %p67 = scmp.eq.s32.totalorder %s24, 1
      %p68 = por %p66, %p67
      %p70 = scmp.ne.s32.totalorder %s55, %s69
      %p71 = scmp.eq.s32.totalorder %s24, 0
      %p72 = por %p70, %p71
      %s74 = sadd.s32 %s73, 1
      %p77 = scmp.eq.s32.totalorder %s18, 1
      %p78 = scmp.ne.s32.totalorder %s73, %s75
      %p79 = scmp.eq.s32.totalorder %s18, 0
      %p80 = por %p78, %p79
      %p81 = scmp.ne.s32.totalorder %s73, %s75
      %p82 = scmp.eq.s32.totalorder %s23, 1
      %p83 = por %p81, %p82
      %p84 = scmp.ne.s32.totalorder %s75, %s76
      %p85 = scmp.eq.s32.totalorder %s23, 0
      %p86 = por %p84, %p85
      %p87 = scmp.ne.s32.totalorder %s75, %s76
      %p88 = scmp.eq.s32.totalorder %s24, 1
      %p89 = por %p87, %p88
      %p91 = scmp.ne.s32.totalorder %s76, %s90
      %p92 = scmp.eq.s32.totalorder %s24, 0
      %p93 = por %p91, %p92
      %s95 = sadd.s32 %s94, 1
      %p98 = scmp.eq.s32.totalorder %s18, 1
      %p99 = scmp.ne.s32.totalorder %s94, %s96
      %p100 = scmp.eq.s32.totalorder %s18, 0
      %p101 = por %p99, %p100
      %p102 = scmp.ne.s32.totalorder %s94, %s96
      %p103 = scmp.eq.s32.totalorder %s23, 1
      %p104 = por %p102, %p103
      %p105 = scmp.ne.s32.totalorder %s96, %s97
      %p106 = scmp.eq.s32.totalorder %s23, 0
      %p107 = por %p105, %p106
      %p108 = scmp.ne.s32.totalorder %s96, %s97
      %p109 = scmp.eq.s32.totalorder %s24, 1
      %p110 = por %p108, %p109
      %p112 = scmp.ne.s32.totalorder %s97, %s111
      %p113 = scmp.eq.s32.totalorder %s24, 0
      %p114 = por %p112, %p113
      %s116 = sadd.s32 %s115, 1
      %p119 = scmp.eq.s32.totalorder %s18, 1
      %p120 = scmp.ne.s32.totalorder %s115, %s117
      %p121 = scmp.eq.s32.totalorder %s18, 0
      %p122 = por %p120, %p121
      %p123 = scmp.ne.s32.totalorder %s115, %s117
      %p124 = scmp.eq.s32.totalorder %s23, 1
      %p125 = por %p123, %p124
      %p126 = scmp.ne.s32.totalorder %s117, %s118
      %p127 = scmp.eq.s32.totalorder %s23, 0
      %p128 = por %p126, %p127
      %p129 = scmp.ne.s32.totalorder %s117, %s118
      %p130 = scmp.eq.s32.totalorder %s24, 1
      %p131 = por %p129, %p130
      %p133 = scmp.ne.s32.totalorder %s118, %s132
      %p134 = scmp.eq.s32.totalorder %s24, 0
      %p135 = por %p133, %p134
      %s137 = sadd.s32 %s136, 1
      %p140 = scmp.eq.s32.totalorder %s18, 1
      %p141 = scmp.ne.s32.totalorder %s136, %s138
      %p142 = scmp.eq.s32.totalorder %s18, 0
      %p143 = por %p141, %p142
      %p144 = scmp.ne.s32.totalorder %s136, %s138
      %p145 = scmp.eq.s32.totalorder %s23, 1
      %p146 = por %p144, %p145
      %p147 = scmp.ne.s32.totalorder %s138, %s139
      %p148 = scmp.eq.s32.totalorder %s23, 0
      %p149 = por %p147, %p148
      %p150 = scmp.ne.s32.totalorder %s138, %s139
      %p151 = scmp.eq.s32.totalorder %s24, 1
      %p152 = por %p150, %p151
      %p154 = scmp.ne.s32.totalorder %s139, %s153
      %p155 = scmp.eq.s32.totalorder %s24, 0
      %p156 = por %p154, %p155
      %s158 = sadd.s32 %s157, 1
      %p161 = scmp.eq.s32.totalorder %s18, 1
      %p162 = scmp.ne.s32.totalorder %s157, %s159
      %p163 = scmp.eq.s32.totalorder %s18, 0
      %p164 = por %p162, %p163
      %p165 = scmp.ne.s32.totalorder %s157, %s159
      %p166 = scmp.eq.s32.totalorder %s23, 1
      %p167 = por %p165, %p166
      %p168 = scmp.ne.s32.totalorder %s159, %s160
      %p169 = scmp.eq.s32.totalorder %s23, 0
      %p170 = por %p168, %p169
      %p171 = scmp.ne.s32.totalorder %s159, %s160
      %p172 = scmp.eq.s32.totalorder %s24, 1
      %p173 = por %p171, %p172
      %p175 = scmp.ne.s32.totalorder %s160, %s174
      %p176 = scmp.eq.s32.totalorder %s24, 0
      %p177 = por %p175, %p176
      %s178 = ssub.s32 %s18, %s25
      %p179 = scmp.eq.s32.totalorder %s178, 0
      %s181 = sadd.s32 %s180, 1
      %s182 = scalar_select %p179, %s180, %s181
      %p185 = pneg %p179
      %p186 = scmp.eq.s32.totalorder %s18, 1
      %p187 = por %p185, %p186
      %p188 = scmp.ne.s32.totalorder %s180, %s183
      %p189 = scmp.eq.s32.totalorder %s18, 0
      %p190 = por %p188, %p189
      %p191 = scmp.ne.s32.totalorder %s180, %s183
      %p192 = scmp.eq.s32.totalorder %s23, 1
      %p193 = por %p191, %p192
      %p194 = scmp.ne.s32.totalorder %s183, %s184
      %p195 = scmp.eq.s32.totalorder %s23, 0
      %p196 = por %p194, %p195
      %p197 = scmp.ne.s32.totalorder %s183, %s184
      %p198 = scmp.eq.s32.totalorder %s24, 1
      %p199 = por %p197, %p198
      %p201 = scmp.ne.s32.totalorder %s184, %s200
      %p202 = scmp.eq.s32.totalorder %s24, 0
      %p203 = por %p201, %p202
      %p204 = scmp.le.s32.totalorder 1, %s18
      %p205 = scmp.lt.s32.totalorder %s18, 3
      %p206 = pnand %p204, %p205
      %p207 = pneg %p206
      // Predicated region
      $region9: #{tpu_custom_call.1} parent=5 // pred_check
        _
      $region10: #{tpu_custom_call.1} parent=5 // pred_check_branch
        %209 = sbr.rel (%p206) target = $region12
      $region11: #{tpu_custom_call.1} parent=5 // pred_region
        %s210 = ssub.s32 %s18, 1
        // Predicated region
        $region13: #{tpu_custom_call.1} parent=11 // pred_check
          %p211 = pneg %p65
        $region14: #{tpu_custom_call.1} parent=11 // pred_check_branch
          %213 = sbr.rel (%p211) target = $region16
        $region15: #{tpu_custom_call.1} parent=11 // pred_region
          _
        $region16: #{tpu_custom_call.1} parent=11 // pred_fallthru
          _
        // Predicated region
        $region17: #{tpu_custom_call.1} parent=11 // pred_check
          %p214 = pneg %p86
        $region18: #{tpu_custom_call.1} parent=11 // pred_check_branch
          %216 = sbr.rel (%p214) target = $region20
        $region19: #{tpu_custom_call.1} parent=11 // pred_region
          _
        $region20: #{tpu_custom_call.1} parent=11 // pred_fallthru
          _
        // Predicated region
        $region21: #{tpu_custom_call.1} parent=11 // pred_check
          %p217 = pneg %p107
        $region22: #{tpu_custom_call.1} parent=11 // pred_check_branch
          %219 = sbr.rel (%p217) target = $region24
        $region23: #{tpu_custom_call.1} parent=11 // pred_region
          _
        $region24: #{tpu_custom_call.1} parent=11 // pred_fallthru
          _
        // Predicated region
        $region25: #{tpu_custom_call.1} parent=11 // pred_check
          %p220 = pneg %p128
        $region26: #{tpu_custom_call.1} parent=11 // pred_check_branch
          %222 = sbr.rel (%p220) target = $region28
        $region27: #{tpu_custom_call.1} parent=11 // pred_region
          _
        $region28: #{tpu_custom_call.1} parent=11 // pred_fallthru
          _
        // Predicated region
        $region29: #{tpu_custom_call.1} parent=11 // pred_check
          %p223 = pneg %p149
        $region30: #{tpu_custom_call.1} parent=11 // pred_check_branch
          %225 = sbr.rel (%p223) target = $region32
        $region31: #{tpu_custom_call.1} parent=11 // pred_region
          _
        $region32: #{tpu_custom_call.1} parent=11 // pred_fallthru
          _
        // Predicated region
        $region33: #{tpu_custom_call.1} parent=11 // pred_check
          %p226 = pneg %p170
        $region34: #{tpu_custom_call.1} parent=11 // pred_check_branch
          %228 = sbr.rel (%p226) target = $region36
        $region35: #{tpu_custom_call.1} parent=11 // pred_region
          _
        $region36: #{tpu_custom_call.1} parent=11 // pred_fallthru
          _
      $region12: #{tpu_custom_call.1} parent=5 // pred_fallthru
        _
      %p229 = scmp.lt.s32.totalorder %s18, 2
      // Predicated region
      $region37: #{tpu_custom_call.1} parent=5 // pred_check
        %p230 = pneg %p229
      $region38: #{tpu_custom_call.1} parent=5 // pred_check_branch
        %232 = sbr.rel (%p230) target = $region40
      $region39: #{tpu_custom_call.1} parent=5 // pred_region
        // Predicated region
        $region41: #{tpu_custom_call.1} parent=39 // pred_check
          %p233 = pneg %p38
        $region42: #{tpu_custom_call.1} parent=39 // pred_check_branch
          %235 = sbr.rel (%p233) target = $region44
        $region43: #{tpu_custom_call.1} parent=39 // pred_region
          %p236 = scmp.lt.s32.totalorder %s18, 1
          %s237 = scalar_select %p236, %s18, 1
          %s238 = scalar_lea.vmem %s0, %s237
        $region44: #{tpu_custom_call.1} parent=39 // pred_fallthru
          _
      $region40: #{tpu_custom_call.1} parent=5 // pred_fallthru
        _
      %p239 = scmp.le.s32.totalorder 1, %s18
      %p240 = scmp.lt.s32.totalorder %s18, 3
      %p241 = pnand %p239, %p240
      %p242 = pneg %p241
      // Predicated region
      $region45: #{tpu_custom_call.1} parent=5 // pred_check
        _
      $region46: #{tpu_custom_call.1} parent=5 // pred_check_branch
        %244 = sbr.rel (%p241) target = $region48
      $region47: #{tpu_custom_call.1} parent=5 // pred_region
        %s245 = ssub.s32 %s18, 1
        %p246 = scmp.lt.s32.totalorder %s23, 1
        %s247 = scalar_select %p246, %s23, 1
        %s248 = scalar_lea.vmem %s0, %s247
        %p249 = pneg %p44
        %p250 = pneg %p41
        %p251 = pneg %p65
        %p252 = pneg %p62
        %p253 = pneg %p86
        %p254 = pneg %p83
        %p255 = pneg %p107
        %p256 = pneg %p104
        %p257 = pneg %p128
        %p258 = pneg %p125
        %p259 = pneg %p149
        %p260 = pneg %p146
        %p261 = pneg %p170
        %p262 = pneg %p167
        %p263 = pneg %p196
        %p264 = pneg %p193
        %s265 = sand.u32 %s183, 1
        %s266 = scalar_lea.sflag [#allocation4], %s265
        %s267 = sand.u32 %s183, 1
        %s268 = scalar_lea.vmem [#allocation3], %s267
        %p269 = scmp.lt.s32.totalorder %s23, 1
        %s270 = scalar_select %p269, %s23, 1
        %s271 = scalar_lea.vmem %s0, %s270
        %v273 = vld [vmem:[%s271] sm:$0x1]
        %v274 = vld [vmem:[%s1] sm:$0xf]
        %v275 = vld [vmem:[%s1 + $0x4] sm:$0xf]
        %v276 = vld [vmem:[%s1 + $0x8] sm:$0xf]
        %v277 = vld [vmem:[%s1 + $0xc] sm:$0xf]
        %v278 = vld [vmem:[%s1 + $0x10] sm:$0xf]
        %v279 = vld [vmem:[%s1 + $0x14] sm:$0xf]
        %v280 = vld [vmem:[%s1 + $0x18] sm:$0xf]
        %v281 = vld [vmem:[%s1 + $0x1c] sm:$0xf]
        %v282 = vld [vmem:[%s1 + $0x20] sm:$0xf]
        %v283 = vld [vmem:[%s1 + $0x24] sm:$0xf]
        %v284 = vld [vmem:[%s1 + $0x28] sm:$0xf]
        %v285 = vld [vmem:[%s1 + $0x2c] sm:$0xf]
        %v286 = vld [vmem:[%s1 + $0x30] sm:$0xf]
        %v287 = vld [vmem:[%s1 + $0x34] sm:$0xf]
        %v288 = vld [vmem:[%s1 + $0x38] sm:$0xf]
        %v289 = vld [vmem:[%s1 + $0x3c] sm:$0xf]
        %291 = vset.pattern.permute.xlu0 0
        %292 = vperm.xlu0 %291, %v274
        %v293 = vpop.permute.xlu0 %292
        %v296 = vunpack.c.l.s4 839922192
        %v297 = vunpack.c.0.s8 %v296
        %v298 = vlaneseq
        %v299 = vshrl.u32 %v298, 7
        %v300 = vsub.s32 %v297, %v299
        %v301 = vrot.slane %v293, %v300
        %303 = vset.pattern.permute.xlu0 0
        %304 = vperm.xlu0 %303, %v275
        %v305 = vpop.permute.xlu0 %304
        %v308 = vunpack.c.l.s4 839922192
        %v309 = vunpack.c.0.s8 %v308
        %v310 = vlaneseq
        %v311 = vshrl.u32 %v310, 7
        %v312 = vsub.s32 %v309, %v311
        %v313 = vrot.slane %v305, %v312
        %315 = vset.pattern.permute.xlu0 0
        %316 = vperm.xlu0 %315, %v276
        %v317 = vpop.permute.xlu0 %316
        %v320 = vunpack.c.l.s4 839922192
        %v321 = vunpack.c.0.s8 %v320
        %v322 = vlaneseq
        %v323 = vshrl.u32 %v322, 7
        %v324 = vsub.s32 %v321, %v323
        %v325 = vrot.slane %v317, %v324
        %327 = vset.pattern.permute.xlu0 0
        %328 = vperm.xlu0 %327, %v277
        %v329 = vpop.permute.xlu0 %328
        %v332 = vunpack.c.l.s4 839922192
        %v333 = vunpack.c.0.s8 %v332
        %v334 = vlaneseq
        %v335 = vshrl.u32 %v334, 7
        %v336 = vsub.s32 %v333, %v335
        %v337 = vrot.slane %v329, %v336
        %339 = vset.pattern.permute.xlu0 0
        %340 = vperm.xlu0 %339, %v278
        %v341 = vpop.permute.xlu0 %340
        %v344 = vunpack.c.l.s4 839922192
        %v345 = vunpack.c.0.s8 %v344
        %v346 = vlaneseq
        %v347 = vshrl.u32 %v346, 7
        %v348 = vsub.s32 %v345, %v347
        %v349 = vrot.slane %v341, %v348
        %351 = vset.pattern.permute.xlu0 0
        %352 = vperm.xlu0 %351, %v279
        %v353 = vpop.permute.xlu0 %352
        %v356 = vunpack.c.l.s4 839922192
        %v357 = vunpack.c.0.s8 %v356
        %v358 = vlaneseq
        %v359 = vshrl.u32 %v358, 7
        %v360 = vsub.s32 %v357, %v359
        %v361 = vrot.slane %v353, %v360
        %363 = vset.pattern.permute.xlu0 0
        %364 = vperm.xlu0 %363, %v280
        %v365 = vpop.permute.xlu0 %364
        %v368 = vunpack.c.l.s4 839922192
        %v369 = vunpack.c.0.s8 %v368
        %v370 = vlaneseq
        %v371 = vshrl.u32 %v370, 7
        %v372 = vsub.s32 %v369, %v371
        %v373 = vrot.slane %v365, %v372
        %375 = vset.pattern.permute.xlu0 0
        %376 = vperm.xlu0 %375, %v281
        %v377 = vpop.permute.xlu0 %376
        %v380 = vunpack.c.l.s4 839922192
        %v381 = vunpack.c.0.s8 %v380
        %v382 = vlaneseq
        %v383 = vshrl.u32 %v382, 7
        %v384 = vsub.s32 %v381, %v383
        %v385 = vrot.slane %v377, %v384
        %387 = vset.pattern.permute.xlu0 0
        %388 = vperm.xlu0 %387, %v282
        %v389 = vpop.permute.xlu0 %388
        %v392 = vunpack.c.l.s4 839922192
        %v393 = vunpack.c.0.s8 %v392
        %v394 = vlaneseq
        %v395 = vshrl.u32 %v394, 7
        %v396 = vsub.s32 %v393, %v395
        %v397 = vrot.slane %v389, %v396
        %399 = vset.pattern.permute.xlu0 0
        %400 = vperm.xlu0 %399, %v283
        %v401 = vpop.permute.xlu0 %400
        %v404 = vunpack.c.l.s4 839922192
        %v405 = vunpack.c.0.s8 %v404
        %v406 = vlaneseq
        %v407 = vshrl.u32 %v406, 7
        %v408 = vsub.s32 %v405, %v407
        %v409 = vrot.slane %v401, %v408
        %411 = vset.pattern.permute.xlu0 0
        %412 = vperm.xlu0 %411, %v284
        %v413 = vpop.permute.xlu0 %412
        %v416 = vunpack.c.l.s4 839922192
        %v417 = vunpack.c.0.s8 %v416
        %v418 = vlaneseq
        %v419 = vshrl.u32 %v418, 7
        %v420 = vsub.s32 %v417, %v419
        %v421 = vrot.slane %v413, %v420
        %423 = vset.pattern.permute.xlu0 0
        %424 = vperm.xlu0 %423, %v285
        %v425 = vpop.permute.xlu0 %424
        %v428 = vunpack.c.l.s4 839922192
        %v429 = vunpack.c.0.s8 %v428
        %v430 = vlaneseq
        %v431 = vshrl.u32 %v430, 7
        %v432 = vsub.s32 %v429, %v431
        %v433 = vrot.slane %v425, %v432
        %435 = vset.pattern.permute.xlu0 0
        %436 = vperm.xlu0 %435, %v286
        %v437 = vpop.permute.xlu0 %436
        %v440 = vunpack.c.l.s4 839922192
        %v441 = vunpack.c.0.s8 %v440
        %v442 = vlaneseq
        %v443 = vshrl.u32 %v442, 7
        %v444 = vsub.s32 %v441, %v443
        %v445 = vrot.slane %v437, %v444
        %447 = vset.pattern.permute.xlu0 0
        %448 = vperm.xlu0 %447, %v287
        %v449 = vpop.permute.xlu0 %448
        %v452 = vunpack.c.l.s4 839922192
        %v453 = vunpack.c.0.s8 %v452
        %v454 = vlaneseq
        %v455 = vshrl.u32 %v454, 7
        %v456 = vsub.s32 %v453, %v455
        %v457 = vrot.slane %v449, %v456
        %459 = vset.pattern.permute.xlu0 0
        %460 = vperm.xlu0 %459, %v288
        %v461 = vpop.permute.xlu0 %460
        %v464 = vunpack.c.l.s4 839922192
        %v465 = vunpack.c.0.s8 %v464
        %v466 = vlaneseq
        %v467 = vshrl.u32 %v466, 7
        %v468 = vsub.s32 %v465, %v467
        %v469 = vrot.slane %v461, %v468
        %471 = vset.pattern.permute.xlu0 0
        %472 = vperm.xlu0 %471, %v289
        %v473 = vpop.permute.xlu0 %472
        %v476 = vunpack.c.l.s4 839922192
        %v477 = vunpack.c.0.s8 %v476
        %v478 = vlaneseq
        %v479 = vshrl.u32 %v478, 7
        %v480 = vsub.s32 %v477, %v479
        %v481 = vrot.slane %v473, %v480
        %v483 = vpack.i.b16 %v273, %v273
        %v485 = vlaneseq
        %v486 = vshrl.u32 %v485, 7
        %v487 = vsub.s32 0, %v486
        %v488 = vrot.slane %v483, %v487
        %v490 = vunpack.c.l.b16 %v488
        %v491 = vpack.c.b16 %v490, %v490
        %v493 = vmul.bf16 %v301, %v491
        %v494 = vmul.bf16 %v313, %v491
        %v495 = vmul.bf16 %v325, %v491
        %v496 = vmul.bf16 %v337, %v491
        %v497 = vmul.bf16 %v349, %v491
        %v498 = vmul.bf16 %v361, %v491
        %v499 = vmul.bf16 %v373, %v491
        %v500 = vmul.bf16 %v385, %v491
        %v501 = vmul.bf16 %v397, %v491
        %v502 = vmul.bf16 %v409, %v491
        %v503 = vmul.bf16 %v421, %v491
        %v504 = vmul.bf16 %v433, %v491
        %v505 = vmul.bf16 %v445, %v491
        %v506 = vmul.bf16 %v457, %v491
        %v507 = vmul.bf16 %v469, %v491
        %v508 = vmul.bf16 %v481, %v491
        %v509 = vld [vmem:[%s2] sm:$0xf]
        %v510 = vld [vmem:[%s2 + $0x4] sm:$0xf]
        %v511 = vld [vmem:[%s2 + $0x8] sm:$0xf]
        %v512 = vld [vmem:[%s2 + $0xc] sm:$0xf]
        %v513 = vld [vmem:[%s2 + $0x10] sm:$0xf]
        %v514 = vld [vmem:[%s2 + $0x14] sm:$0xf]
        %v515 = vld [vmem:[%s2 + $0x18] sm:$0xf]
        %v516 = vld [vmem:[%s2 + $0x1c] sm:$0xf]
        %v517 = vld [vmem:[%s2 + $0x20] sm:$0xf]
        %v518 = vld [vmem:[%s2 + $0x24] sm:$0xf]
        %v519 = vld [vmem:[%s2 + $0x28] sm:$0xf]
        %v520 = vld [vmem:[%s2 + $0x2c] sm:$0xf]
        %v521 = vld [vmem:[%s2 + $0x30] sm:$0xf]
        %v522 = vld [vmem:[%s2 + $0x34] sm:$0xf]
        %v523 = vld [vmem:[%s2 + $0x38] sm:$0xf]
        %v524 = vld [vmem:[%s2 + $0x3c] sm:$0xf]
        %526 = vset.pattern.permute.xlu0 0
        %527 = vperm.xlu0 %526, %v509
        %v528 = vpop.permute.xlu0 %527
        %v531 = vunpack.c.l.s4 839922192
        %v532 = vunpack.c.0.s8 %v531
        %v533 = vlaneseq
        %v534 = vshrl.u32 %v533, 7
        %v535 = vsub.s32 %v532, %v534
        %v536 = vrot.slane %v528, %v535
        %538 = vset.pattern.permute.xlu0 0
        %539 = vperm.xlu0 %538, %v510
        %v540 = vpop.permute.xlu0 %539
        %v543 = vunpack.c.l.s4 839922192
        %v544 = vunpack.c.0.s8 %v543
        %v545 = vlaneseq
        %v546 = vshrl.u32 %v545, 7
        %v547 = vsub.s32 %v544, %v546
        %v548 = vrot.slane %v540, %v547
        %550 = vset.pattern.permute.xlu0 0
        %551 = vperm.xlu0 %550, %v511
        %v552 = vpop.permute.xlu0 %551
        %v555 = vunpack.c.l.s4 839922192
        %v556 = vunpack.c.0.s8 %v555
        %v557 = vlaneseq
        %v558 = vshrl.u32 %v557, 7
        %v559 = vsub.s32 %v556, %v558
        %v560 = vrot.slane %v552, %v559
        %562 = vset.pattern.permute.xlu0 0
        %563 = vperm.xlu0 %562, %v512
        %v564 = vpop.permute.xlu0 %563
        %v567 = vunpack.c.l.s4 839922192
        %v568 = vunpack.c.0.s8 %v567
        %v569 = vlaneseq
        %v570 = vshrl.u32 %v569, 7
        %v571 = vsub.s32 %v568, %v570
        %v572 = vrot.slane %v564, %v571
        %574 = vset.pattern.permute.xlu0 0
        %575 = vperm.xlu0 %574, %v513
        %v576 = vpop.permute.xlu0 %575
        %v579 = vunpack.c.l.s4 839922192
        %v580 = vunpack.c.0.s8 %v579
        %v581 = vlaneseq
        %v582 = vshrl.u32 %v581, 7
        %v583 = vsub.s32 %v580, %v582
        %v584 = vrot.slane %v576, %v583
        %586 = vset.pattern.permute.xlu0 0
        %587 = vperm.xlu0 %586, %v514
        %v588 = vpop.permute.xlu0 %587
        %v591 = vunpack.c.l.s4 839922192
        %v592 = vunpack.c.0.s8 %v591
        %v593 = vlaneseq
        %v594 = vshrl.u32 %v593, 7
        %v595 = vsub.s32 %v592, %v594
        %v596 = vrot.slane %v588, %v595
        %598 = vset.pattern.permute.xlu0 0
        %599 = vperm.xlu0 %598, %v515
        %v600 = vpop.permute.xlu0 %599
        %v603 = vunpack.c.l.s4 839922192
        %v604 = vunpack.c.0.s8 %v603
        %v605 = vlaneseq
        %v606 = vshrl.u32 %v605, 7
        %v607 = vsub.s32 %v604, %v606
        %v608 = vrot.slane %v600, %v607
        %610 = vset.pattern.permute.xlu0 0
        %611 = vperm.xlu0 %610, %v516
        %v612 = vpop.permute.xlu0 %611
        %v615 = vunpack.c.l.s4 839922192
        %v616 = vunpack.c.0.s8 %v615
        %v617 = vlaneseq
        %v618 = vshrl.u32 %v617, 7
        %v619 = vsub.s32 %v616, %v618
        %v620 = vrot.slane %v612, %v619
        %622 = vset.pattern.permute.xlu0 0
        %623 = vperm.xlu0 %622, %v517
        %v624 = vpop.permute.xlu0 %623
        %v627 = vunpack.c.l.s4 839922192
        %v628 = vunpack.c.0.s8 %v627
        %v629 = vlaneseq
        %v630 = vshrl.u32 %v629, 7
        %v631 = vsub.s32 %v628, %v630
        %v632 = vrot.slane %v624, %v631
        %634 = vset.pattern.permute.xlu0 0
        %635 = vperm.xlu0 %634, %v518
        %v636 = vpop.permute.xlu0 %635
        %v639 = vunpack.c.l.s4 839922192
        %v640 = vunpack.c.0.s8 %v639
        %v641 = vlaneseq
        %v642 = vshrl.u32 %v641, 7
        %v643 = vsub.s32 %v640, %v642
        %v644 = vrot.slane %v636, %v643
        %646 = vset.pattern.permute.xlu0 0
        %647 = vperm.xlu0 %646, %v519
        %v648 = vpop.permute.xlu0 %647
        %v651 = vunpack.c.l.s4 839922192
        %v652 = vunpack.c.0.s8 %v651
        %v653 = vlaneseq
        %v654 = vshrl.u32 %v653, 7
        %v655 = vsub.s32 %v652, %v654
        %v656 = vrot.slane %v648, %v655
        %658 = vset.pattern.permute.xlu0 0
        %659 = vperm.xlu0 %658, %v520
        %v660 = vpop.permute.xlu0 %659
        %v663 = vunpack.c.l.s4 839922192
        %v664 = vunpack.c.0.s8 %v663
        %v665 = vlaneseq
        %v666 = vshrl.u32 %v665, 7
        %v667 = vsub.s32 %v664, %v666
        %v668 = vrot.slane %v660, %v667
        %670 = vset.pattern.permute.xlu0 0
        %671 = vperm.xlu0 %670, %v521
        %v672 = vpop.permute.xlu0 %671
        %v675 = vunpack.c.l.s4 839922192
        %v676 = vunpack.c.0.s8 %v675
        %v677 = vlaneseq
        %v678 = vshrl.u32 %v677, 7
        %v679 = vsub.s32 %v676, %v678
        %v680 = vrot.slane %v672, %v679
        %682 = vset.pattern.permute.xlu0 0
        %683 = vperm.xlu0 %682, %v522
        %v684 = vpop.permute.xlu0 %683
        %v687 = vunpack.c.l.s4 839922192
        %v688 = vunpack.c.0.s8 %v687
        %v689 = vlaneseq
        %v690 = vshrl.u32 %v689, 7
        %v691 = vsub.s32 %v688, %v690
        %v692 = vrot.slane %v684, %v691
        %694 = vset.pattern.permute.xlu0 0
        %695 = vperm.xlu0 %694, %v523
        %v696 = vpop.permute.xlu0 %695
        %v699 = vunpack.c.l.s4 839922192
        %v700 = vunpack.c.0.s8 %v699
        %v701 = vlaneseq
        %v702 = vshrl.u32 %v701, 7
        %v703 = vsub.s32 %v700, %v702
        %v704 = vrot.slane %v696, %v703
        %706 = vset.pattern.permute.xlu0 0
        %707 = vperm.xlu0 %706, %v524
        %v708 = vpop.permute.xlu0 %707
        %v711 = vunpack.c.l.s4 839922192
        %v712 = vunpack.c.0.s8 %v711
        %v713 = vlaneseq
        %v714 = vshrl.u32 %v713, 7
        %v715 = vsub.s32 %v712, %v714
        %v716 = vrot.slane %v708, %v715
        %v717 = vadd.bf16 %v493, %v536
        %v718 = vadd.bf16 %v494, %v548
        %v719 = vadd.bf16 %v495, %v560
        %v720 = vadd.bf16 %v496, %v572
        %v721 = vadd.bf16 %v497, %v584
        %v722 = vadd.bf16 %v498, %v596
        %v723 = vadd.bf16 %v499, %v608
        %v724 = vadd.bf16 %v500, %v620
        %v725 = vadd.bf16 %v501, %v632
        %v726 = vadd.bf16 %v502, %v644
        %v727 = vadd.bf16 %v503, %v656
        %v728 = vadd.bf16 %v504, %v668
        %v729 = vadd.bf16 %v505, %v680
        %v730 = vadd.bf16 %v506, %v692
        %v731 = vadd.bf16 %v507, %v704
        %v732 = vadd.bf16 %v508, %v716
        %v733 = vmax.bf16 %v717, 0
        %v734 = vmax.bf16 %v718, 0
        %v735 = vmax.bf16 %v719, 0
        %v736 = vmax.bf16 %v720, 0
        %v737 = vmax.bf16 %v721, 0
        %v738 = vmax.bf16 %v722, 0
        %v739 = vmax.bf16 %v723, 0
        %v740 = vmax.bf16 %v724, 0
        %v741 = vmax.bf16 %v725, 0
        %v742 = vmax.bf16 %v726, 0
        %v743 = vmax.bf16 %v727, 0
        %v744 = vmax.bf16 %v728, 0
        %v745 = vmax.bf16 %v729, 0
        %v746 = vmax.bf16 %v730, 0
        %v747 = vmax.bf16 %v731, 0
        %v748 = vmax.bf16 %v732, 0
        %v749 = vld [vmem:[%s3] sm:$0xf]
        %v750 = vld [vmem:[%s3 + $0x4] sm:$0xf]
        %v751 = vld [vmem:[%s3 + $0x8] sm:$0xf]
        %v752 = vld [vmem:[%s3 + $0xc] sm:$0xf]
        %v753 = vld [vmem:[%s3 + $0x10] sm:$0xf]
        %v754 = vld [vmem:[%s3 + $0x14] sm:$0xf]
        %v755 = vld [vmem:[%s3 + $0x18] sm:$0xf]
        %v756 = vld [vmem:[%s3 + $0x1c] sm:$0xf]
        %v757 = vld [vmem:[%s3 + $0x20] sm:$0xf]
        %v758 = vld [vmem:[%s3 + $0x24] sm:$0xf]
        %v759 = vld [vmem:[%s3 + $0x28] sm:$0xf]
        %v760 = vld [vmem:[%s3 + $0x2c] sm:$0xf]
        %v761 = vld [vmem:[%s3 + $0x30] sm:$0xf]
        %v762 = vld [vmem:[%s3 + $0x34] sm:$0xf]
        %v763 = vld [vmem:[%s3 + $0x38] sm:$0xf]
        %v764 = vld [vmem:[%s3 + $0x3c] sm:$0xf]
        %v765 = vld [vmem:[%s4] sm:$0xff]
        %v766 = vld [vmem:[%s4 + $0x8] sm:$0xff]
        %v767 = vld [vmem:[%s4 + $0x10] sm:$0xff]
        %v768 = vld [vmem:[%s4 + $0x18] sm:$0xff]
        %v769 = vld [vmem:[%s4 + $0x20] sm:$0xff]
        %v770 = vld [vmem:[%s4 + $0x28] sm:$0xff]
        %v771 = vld [vmem:[%s4 + $0x30] sm:$0xff]
        %v772 = vld [vmem:[%s4 + $0x38] sm:$0xff]
        %v773 = vld [vmem:[%s4 + $0x40] sm:$0xff]
        %v774 = vld [vmem:[%s4 + $0x48] sm:$0xff]
        %v775 = vld [vmem:[%s4 + $0x50] sm:$0xff]
        %v776 = vld [vmem:[%s4 + $0x58] sm:$0xff]
        %v777 = vld [vmem:[%s4 + $0x60] sm:$0xff]
        %v778 = vld [vmem:[%s4 + $0x68] sm:$0xff]
        %v779 = vld [vmem:[%s4 + $0x70] sm:$0xff]
        %v780 = vld [vmem:[%s4 + $0x78] sm:$0xff]
        %782 = vset.pattern.permute.xlu0 0
        %783 = vperm.xlu0 %782, %v765
        %v784 = vpop.permute.xlu0 %783
        %787 = vset.pattern.permute.xlu0 0
        %788 = vperm.xlu0 %787, %v766
        %v789 = vpop.permute.xlu0 %788
        %792 = vset.pattern.permute.xlu0 0
        %793 = vperm.xlu0 %792, %v767
        %v794 = vpop.permute.xlu0 %793
        %797 = vset.pattern.permute.xlu0 0
        %798 = vperm.xlu0 %797, %v768
        %v799 = vpop.permute.xlu0 %798
        %802 = vset.pattern.permute.xlu0 0
        %803 = vperm.xlu0 %802, %v769
        %v804 = vpop.permute.xlu0 %803
        %807 = vset.pattern.permute.xlu0 0
        %808 = vperm.xlu0 %807, %v770
        %v809 = vpop.permute.xlu0 %808
        %812 = vset.pattern.permute.xlu0 0
        %813 = vperm.xlu0 %812, %v771
        %v814 = vpop.permute.xlu0 %813
        %817 = vset.pattern.permute.xlu0 0
        %818 = vperm.xlu0 %817, %v772
        %v819 = vpop.permute.xlu0 %818
        %822 = vset.pattern.permute.xlu0 0
        %823 = vperm.xlu0 %822, %v773
        %v824 = vpop.permute.xlu0 %823
        %827 = vset.pattern.permute.xlu0 0
        %828 = vperm.xlu0 %827, %v774
        %v829 = vpop.permute.xlu0 %828
        %832 = vset.pattern.permute.xlu0 0
        %833 = vperm.xlu0 %832, %v775
        %v834 = vpop.permute.xlu0 %833
        %837 = vset.pattern.permute.xlu0 0
        %838 = vperm.xlu0 %837, %v776
        %v839 = vpop.permute.xlu0 %838
        %842 = vset.pattern.permute.xlu0 0
        %843 = vperm.xlu0 %842, %v777
        %v844 = vpop.permute.xlu0 %843
        %847 = vset.pattern.permute.xlu0 0
        %848 = vperm.xlu0 %847, %v778
        %v849 = vpop.permute.xlu0 %848
        %852 = vset.pattern.permute.xlu0 0
        %853 = vperm.xlu0 %852, %v779
        %v854 = vpop.permute.xlu0 %853
        %857 = vset.pattern.permute.xlu0 0
        %858 = vperm.xlu0 %857, %v780
        %v859 = vpop.permute.xlu0 %858
        %v877 = vunpack.c.l.b16 %v749
        %v878 = vunpack.c.l.b16 %v750
        %v879 = vunpack.c.l.b16 %v751
        %v880 = vunpack.c.l.b16 %v752
        %v881 = vunpack.c.l.b16 %v753
        %v882 = vunpack.c.l.b16 %v754
        %v883 = vunpack.c.l.b16 %v755
        %v884 = vunpack.c.l.b16 %v756
        %v885 = vunpack.c.l.b16 %v757
        %v886 = vunpack.c.l.b16 %v758
        %v887 = vunpack.c.l.b16 %v759
        %v888 = vunpack.c.l.b16 %v760
        %v889 = vunpack.c.l.b16 %v761
        %v890 = vunpack.c.l.b16 %v762
        %v891 = vunpack.c.l.b16 %v763
        %v892 = vunpack.c.l.b16 %v764
        %v893 = vpack.c.b16 %v878, %v877
        %v894 = vpack.c.b16 %v880, %v879
        %v895 = vpack.c.b16 %v882, %v881
        %v896 = vpack.c.b16 %v884, %v883
        %v897 = vpack.c.b16 %v886, %v885
        %v898 = vpack.c.b16 %v888, %v887
        %v899 = vpack.c.b16 %v890, %v889
        %v900 = vpack.c.b16 %v892, %v891
        %v925 = vunpack.c.l.b16 %v733
        %v926 = vunpack.c.l.b16 %v734
        %v927 = vunpack.c.l.b16 %v735
        %v928 = vunpack.c.l.b16 %v736
        %v929 = vunpack.c.l.b16 %v737
        %v930 = vunpack.c.l.b16 %v738
        %v931 = vunpack.c.l.b16 %v739
        %v932 = vunpack.c.l.b16 %v740
        %v933 = vunpack.c.l.b16 %v741
        %v934 = vunpack.c.l.b16 %v742
        %v935 = vunpack.c.l.b16 %v743
        %v936 = vunpack.c.l.b16 %v744
        %v937 = vunpack.c.l.b16 %v745
        %v938 = vunpack.c.l.b16 %v746
        %v939 = vunpack.c.l.b16 %v747
        %v940 = vunpack.c.l.b16 %v748
        %v941 = vpack.c.b16 %v926, %v925
        %v942 = vpack.c.b16 %v928, %v927
        %v943 = vpack.c.b16 %v930, %v929
        %v944 = vpack.c.b16 %v932, %v931
        %v945 = vpack.c.b16 %v934, %v933
        %v946 = vpack.c.b16 %v936, %v935
        %v947 = vpack.c.b16 %v938, %v937
        %v948 = vpack.c.b16 %v940, %v939
        %957 = vmatprep.subr.bf16.mxu0 0
        %958 = vmatpush1.bf16.msra.mxu0 %v948
        %959 = vmatprep.subr.bf16.mxu0 0
        %960 = vmatpush1.bf16.msra.mxu0 %v947
        %961 = vmatprep.subr.bf16.mxu0 0
        %962 = vmatpush1.bf16.msra.mxu0 %v946
        %963 = vmatprep.subr.bf16.mxu0 0
        %964 = vmatpush1.bf16.msra.mxu0 %v945
        %965 = vmatprep.subr.bf16.mxu0 0
        %966 = vmatpush1.bf16.msra.mxu0 %v944
        %967 = vmatprep.subr.bf16.mxu0 0
        %968 = vmatpush1.bf16.msra.mxu0 %v943
        %969 = vmatprep.subr.bf16.mxu0 0
        %970 = vmatpush1.bf16.msra.mxu0 %v942
        %971 = vmatprep.subr.bf16.mxu0 0
        %972 = vmatpush1.bf16.msra.mxu0 %v941
        %973 = vmatprep.subr.bf16.mxu0 0
        %974 = vmatpush2.bf16.msra.mxu0 0
        %975 = vmatprep.subr.bf16.mxu0 0
        %976 = vmatpush2.bf16.msra.mxu0 0
        %977 = vmatprep.subr.bf16.mxu0 0
        %978 = vmatpush2.bf16.msra.mxu0 0
        %979 = vmatprep.subr.bf16.mxu0 0
        %980 = vmatpush2.bf16.msra.mxu0 0
        %981 = vmatprep.subr.bf16.mxu0 0
        %982 = vmatpush2.bf16.msra.mxu0 0
        %983 = vmatprep.subr.bf16.mxu0 0
        %984 = vmatpush2.bf16.msra.mxu0 0
        %985 = vmatprep.subr.bf16.mxu0 0
        %986 = vmatpush2.bf16.msra.mxu0 0
        %987 = vmatprep.subr.bf16.mxu0 0
        %988 = vmatpush2.bf16.msra.mxu0 0
        %989 = vmatprep.mubr.bf16.mxu0 0
        %990 = vmatmul.mubr.bf16.gmra.mxu0 %v893
        %v991 = vpop.f32.mrf.mxu0
        %v992 = vadd.f32 %v784, %v991
        %v993 = vpop.f32.mrf.mxu0
        %v994 = vpop.f32.mrf.mxu0
        %v995 = vadd.f32 %v789, %v994
        %v996 = vpop.f32.mrf.mxu0
        %997 = vmatprep.mubr.bf16.mxu0 0
        %998 = vmatmul.mubr.bf16.gmra.mxu0 %v894
        %v999 = vpop.f32.mrf.mxu0
        %v1000 = vadd.f32 %v794, %v999
        %v1001 = vpop.f32.mrf.mxu0
        %v1002 = vpop.f32.mrf.mxu0
        %v1003 = vadd.f32 %v799, %v1002
        %v1004 = vpop.f32.mrf.mxu0
        %1005 = vmatprep.mubr.bf16.mxu0 0
        %1006 = vmatmul.mubr.bf16.gmra.mxu0 %v895
        %v1007 = vpop.f32.mrf.mxu0
        %v1008 = vadd.f32 %v804, %v1007
        %v1009 = vpop.f32.mrf.mxu0
        %v1010 = vpop.f32.mrf.mxu0
        %v1011 = vadd.f32 %v809, %v1010
        %v1012 = vpop.f32.mrf.mxu0
        %1013 = vmatprep.mubr.bf16.mxu0 0
        %1014 = vmatmul.mubr.bf16.gmra.mxu0 %v896
        %v1015 = vpop.f32.mrf.mxu0
        %v1016 = vadd.f32 %v814, %v1015
        %v1017 = vpop.f32.mrf.mxu0
        %v1018 = vpop.f32.mrf.mxu0
        %v1019 = vadd.f32 %v819, %v1018
        %v1020 = vpop.f32.mrf.mxu0
        %1021 = vmatprep.mubr.bf16.mxu0 0
        %1022 = vmatmul.mubr.bf16.gmra.mxu0 %v897
        %v1023 = vpop.f32.mrf.mxu0
        %v1024 = vadd.f32 %v824, %v1023
        %v1025 = vpop.f32.mrf.mxu0
        %v1026 = vpop.f32.mrf.mxu0
        %v1027 = vadd.f32 %v829, %v1026
        %v1028 = vpop.f32.mrf.mxu0
        %1029 = vmatprep.mubr.bf16.mxu0 0
        %1030 = vmatmul.mubr.bf16.gmra.mxu0 %v898
        %v1031 = vpop.f32.mrf.mxu0
        %v1032 = vadd.f32 %v834, %v1031
        %v1033 = vpop.f32.mrf.mxu0
        %v1034 = vpop.f32.mrf.mxu0
        %v1035 = vadd.f32 %v839, %v1034
        %v1036 = vpop.f32.mrf.mxu0
        %1037 = vmatprep.mubr.bf16.mxu0 0
        %1038 = vmatmul.mubr.bf16.gmra.mxu0 %v899
        %v1039 = vpop.f32.mrf.mxu0
        %v1040 = vadd.f32 %v844, %v1039
        %v1041 = vpop.f32.mrf.mxu0
        %v1042 = vpop.f32.mrf.mxu0
        %v1043 = vadd.f32 %v849, %v1042
        %v1044 = vpop.f32.mrf.mxu0
        %1045 = vmatprep.mubr.bf16.mxu0 0
        %1046 = vmatmul.mubr.bf16.gmra.mxu0 %v900
        %v1047 = vpop.f32.mrf.mxu0
        %v1048 = vadd.f32 %v854, %v1047
        %v1049 = vpop.f32.mrf.mxu0
        %v1050 = vpop.f32.mrf.mxu0
        %v1051 = vadd.f32 %v859, %v1050
        %v1052 = vpop.f32.mrf.mxu0
        %1053 = vdwg.mxu0
        %v1054 = vmax.f32 %v992, 0.0
        %v1055 = vmax.f32 %v995, 0.0
        %v1056 = vmax.f32 %v1000, 0.0
        %v1057 = vmax.f32 %v1003, 0.0
        %v1058 = vmax.f32 %v1008, 0.0
        %v1059 = vmax.f32 %v1011, 0.0
        %v1060 = vmax.f32 %v1016, 0.0
        %v1061 = vmax.f32 %v1019, 0.0
        %v1062 = vmax.f32 %v1024, 0.0
        %v1063 = vmax.f32 %v1027, 0.0
        %v1064 = vmax.f32 %v1032, 0.0
        %v1065 = vmax.f32 %v1035, 0.0
        %v1066 = vmax.f32 %v1040, 0.0
        %v1067 = vmax.f32 %v1043, 0.0
        %v1068 = vmax.f32 %v1048, 0.0
        %v1069 = vmax.f32 %v1051, 0.0
        %v1070 = vld [vmem:[%s5] sm:$0xff]
        %v1071 = vld [vmem:[%s5 + $0x8] sm:$0xff]
        %v1072 = vld [vmem:[%s5 + $0x10] sm:$0xff]
        %v1073 = vld [vmem:[%s5 + $0x18] sm:$0xff]
        %v1074 = vld [vmem:[%s5 + $0x20] sm:$0xff]
        %v1075 = vld [vmem:[%s5 + $0x28] sm:$0xff]
        %v1076 = vld [vmem:[%s5 + $0x30] sm:$0xff]
        %v1077 = vld [vmem:[%s5 + $0x38] sm:$0xff]
        %v1078 = vld [vmem:[%s5 + $0x40] sm:$0xff]
        %v1079 = vld [vmem:[%s5 + $0x48] sm:$0xff]
        %v1080 = vld [vmem:[%s5 + $0x50] sm:$0xff]
        %v1081 = vld [vmem:[%s5 + $0x58] sm:$0xff]
        %v1082 = vld [vmem:[%s5 + $0x60] sm:$0xff]
        %v1083 = vld [vmem:[%s5 + $0x68] sm:$0xff]
        %v1084 = vld [vmem:[%s5 + $0x70] sm:$0xff]
        %v1085 = vld [vmem:[%s5 + $0x78] sm:$0xff]
        %1087 = vset.pattern.permute.xlu0 0
        %1088 = vperm.xlu0 %1087, %v1070
        %v1089 = vpop.permute.xlu0 %1088
        %1092 = vset.pattern.permute.xlu0 0
        %1093 = vperm.xlu0 %1092, %v1071
        %v1094 = vpop.permute.xlu0 %1093
        %1097 = vset.pattern.permute.xlu0 0
        %1098 = vperm.xlu0 %1097, %v1072
        %v1099 = vpop.permute.xlu0 %1098
        %1102 = vset.pattern.permute.xlu0 0
        %1103 = vperm.xlu0 %1102, %v1073
        %v1104 = vpop.permute.xlu0 %1103
        %1107 = vset.pattern.permute.xlu0 0
        %1108 = vperm.xlu0 %1107, %v1074
        %v1109 = vpop.permute.xlu0 %1108
        %1112 = vset.pattern.permute.xlu0 0
        %1113 = vperm.xlu0 %1112, %v1075
        %v1114 = vpop.permute.xlu0 %1113
        %1117 = vset.pattern.permute.xlu0 0
        %1118 = vperm.xlu0 %1117, %v1076
        %v1119 = vpop.permute.xlu0 %1118
        %1122 = vset.pattern.permute.xlu0 0
        %1123 = vperm.xlu0 %1122, %v1077
        %v1124 = vpop.permute.xlu0 %1123
        %1127 = vset.pattern.permute.xlu0 0
        %1128 = vperm.xlu0 %1127, %v1078
        %v1129 = vpop.permute.xlu0 %1128
        %1132 = vset.pattern.permute.xlu0 0
        %1133 = vperm.xlu0 %1132, %v1079
        %v1134 = vpop.permute.xlu0 %1133
        %1137 = vset.pattern.permute.xlu0 0
        %1138 = vperm.xlu0 %1137, %v1080
        %v1139 = vpop.permute.xlu0 %1138
        %1142 = vset.pattern.permute.xlu0 0
        %1143 = vperm.xlu0 %1142, %v1081
        %v1144 = vpop.permute.xlu0 %1143
        %1147 = vset.pattern.permute.xlu0 0
        %1148 = vperm.xlu0 %1147, %v1082
        %v1149 = vpop.permute.xlu0 %1148
        %1152 = vset.pattern.permute.xlu0 0
        %1153 = vperm.xlu0 %1152, %v1083
        %v1154 = vpop.permute.xlu0 %1153
        %1157 = vset.pattern.permute.xlu0 0
        %1158 = vperm.xlu0 %1157, %v1084
        %v1159 = vpop.permute.xlu0 %1158
        %1162 = vset.pattern.permute.xlu0 0
        %1163 = vperm.xlu0 %1162, %v1085
        %v1164 = vpop.permute.xlu0 %1163
        %v1166 = vmul.f32 %v1054, %v1089
        %v1167 = vmul.f32 %v1055, %v1094
        %v1168 = vmul.f32 %v1056, %v1099
        %v1169 = vmul.f32 %v1057, %v1104
        %v1170 = vmul.f32 %v1058, %v1109
        %v1171 = vmul.f32 %v1059, %v1114
        %v1172 = vmul.f32 %v1060, %v1119
        %v1173 = vmul.f32 %v1061, %v1124
        %v1174 = vmul.f32 %v1062, %v1129
        %v1175 = vmul.f32 %v1063, %v1134
        %v1176 = vmul.f32 %v1064, %v1139
        %v1177 = vmul.f32 %v1065, %v1144
        %v1178 = vmul.f32 %v1066, %v1149
        %v1179 = vmul.f32 %v1067, %v1154
        %v1180 = vmul.f32 %v1068, %v1159
        %v1181 = vmul.f32 %v1069, %v1164
        %v1182 = vadd.f32 %v1166, %v1167
        %v1183 = vadd.f32 %v1182, %v1168
        %v1184 = vadd.f32 %v1183, %v1169
        %v1185 = vadd.f32 %v1184, %v1170
        %v1186 = vadd.f32 %v1185, %v1171
        %v1187 = vadd.f32 %v1186, %v1172
        %v1188 = vadd.f32 %v1187, %v1173
        %v1189 = vadd.f32 %v1188, %v1174
        %v1190 = vadd.f32 %v1189, %v1175
        %v1191 = vadd.f32 %v1190, %v1176
        %v1192 = vadd.f32 %v1191, %v1177
        %v1193 = vadd.f32 %v1192, %v1178
        %v1194 = vadd.f32 %v1193, %v1179
        %v1195 = vadd.f32 %v1194, %v1180
        %v1196 = vadd.f32 %v1195, %v1181
        %v1197 = vrot.slane %v1196, 4
        %v1198 = vadd.f32 %v1196, %v1197
        %v1199 = vrot.slane %v1198, 2
        %v1200 = vadd.f32 %v1198, %v1199
        %v1201 = vrot.slane %v1200, 1
        %v1202 = vadd.f32 %v1200, %v1201
        %v1203 = vld [vmem:[#allocation2] sm:$0x1]
        %1205 = vset.pattern.permute.xlu0 0
        %1206 = vperm.xlu0 %1205, %v1203
        %v1207 = vpop.permute.xlu0 %1206
        %v1209 = vlaneseq
        %v1210 = vshrl.u32 %v1209, 7
        %v1211 = vsub.s32 0, %v1210
        %v1212 = vrot.slane %v1207, %v1211
        %v1213 = vadd.f32 %v1202, %v1212
        %1214 = vst [vmem:[%s268] sm:$0x1] %v1213
        %s1215 = sand.u32 %s183, 1
        %s1216 = scalar_lea.sflag [#allocation4], %s1215
        %s1217 = sand.u32 %s183, 1
        %s1218 = scalar_lea.vmem [#allocation3], %s1217
        // Predicated region
        $region49: #{tpu_custom_call.1} parent=47 // pred_check
          %p1219 = pneg %p193
        $region50: #{tpu_custom_call.1} parent=47 // pred_check_branch
          %1221 = sbr.rel (%p1219) target = $region52
        $region51: #{tpu_custom_call.1} parent=47 // pred_region
          %s1223 = ssub.s32 16, 16
          %1224 = vsyncadd %s1216, %s1223
          %s1225 = smul.addr %s23, 16
          %s1226 = scalar_lea.hbm %s7, %s1225
          %s1228 = sshll.u32 %s1218, 4
          %s1229 = int_to_ptr.vmem [resolvable:$true] %s1228
          %1231 = dma.vmem_to_hbm [thread:$0]  %s1229, 16, %s1226, %s1216
        $region52: #{tpu_custom_call.1} parent=47 // pred_fallthru
          _
      $region48: #{tpu_custom_call.1} parent=5 // pred_fallthru
        _
      %p1232 = scmp.le.s32.totalorder 2, %s18
      // Predicated region
      $region53: #{tpu_custom_call.1} parent=5 // pred_check
        %p1233 = pneg %p1232
      $region54: #{tpu_custom_call.1} parent=5 // pred_check_branch
        %1235 = sbr.rel (%p1233) target = $region56
      $region55: #{tpu_custom_call.1} parent=5 // pred_region
        %s1236 = ssub.s32 %s18, 2
        // Predicated region
        $region57: #{tpu_custom_call.1} parent=55 // pred_check
          %p1237 = pneg %p199
        $region58: #{tpu_custom_call.1} parent=55 // pred_check_branch
          %1239 = sbr.rel (%p1237) target = $region60
        $region59: #{tpu_custom_call.1} parent=55 // pred_region
          %s1240 = sand.u32 %s184, 1
          %s1241 = scalar_lea.sflag [#allocation4], %s1240
          %s1242 = sand.u32 %s184, 1
          %s1243 = scalar_lea.vmem [#allocation3], %s1242
          %1244 = dma.done %s1241, 16
        $region60: #{tpu_custom_call.1} parent=55 // pred_fallthru
          _
      $region56: #{tpu_custom_call.1} parent=5 // pred_fallthru
        _
    $region6: #{tpu_custom_call.1} parent=1 // loop_footer
      %s22 = sadd.s32 1, %s18
    $region7: #{tpu_custom_call.1} parent=1 // loop_footer_branch
      %17 = sbr.rel target = $region3
    $region8: #{tpu_custom_call.1} parent=1 // loop_exit
      _
    %1245 = vsyncpa [#allocation4], 1
    %s1246 = scalar_lea.sflag [#allocation4], 1
    %1247 = vsyncpa %s1246, 1

</llo_original>
